<compile_context>
chip_gen: v5e
topology: v5e:2x2
jax: 0.10.0
libtpu: 0.0.40
codegen_flags: <defaults>
</compile_context>

<pallas_src>
import functools

import jax
import jax.numpy as jnp
from jax.experimental import pallas as pl
from jax.experimental.pallas import tpu as pltpu


# ----------------------------------------------------------------------------- kernel
def _dist_params_kernel(r_ref, w_ref, b_ref, mu_ref, logsig_ref, *, precision):
    tn = mu_ref.shape[-1]
    # One wide MXU dot covering both heads: [tb, d] x [d, 2*tn] -> [tb, 2*tn], f32 acc.
    acc = jnp.dot(r_ref[...], w_ref[...],
                  preferred_element_type=jnp.float32, precision=precision)
    acc = acc + b_ref[...].astype(jnp.float32)          # fp32 bias add
    mu_ref[...] = acc[:, :tn].astype(mu_ref.dtype)
    logsig_ref[...] = acc[:, tn:].astype(logsig_ref.dtype)


# ------------------------------------------------------------------------ vmem budget
def _vmem_budget_bytes():
    """Generation-aware VMEM budget (~48 MiB on v7x, ~96 MiB on v5e/v6e)."""
    try:
        info = pltpu.get_tpu_info()
        cap = getattr(info, "vmem_capacity_bytes", None)
        if cap:
            return int(cap) * 3 // 4
    except Exception:
        pass
    return 48 * 1024 * 1024   # conservative default, valid on every generation


def _choose_tn(d, tb, w_bpe, io_bpe, budget_bytes):
    """Largest per-head output-column tile that keeps the tile footprint in budget."""
    if d % 128 != 0:
        return d                       # full-width block: no (8,128) constraint applies
    candidates = [d] + [t for t in range(d - 128, 127, -128) if d % t == 0]

    def footprint(tn):
        return (2 * d * 2 * tn * w_bpe          # fused weight tile, double buffered
                + 2 * 1 * 2 * tn * 4            # fp32 bias tile, double buffered
                + 2 * tb * d * io_bpe           # r tile, double buffered
                + 2 * 2 * tb * tn * io_bpe)     # mu/logsig tiles, double buffered

    for tn in candidates:
        if footprint(tn) <= budget_bytes:
            return tn
    return candidates[-1]              # smallest lane-dense tile; limit is clamped below


# ------------------------------------------------------------------ one-time weight pack
def pack_dist_params(w_mu, b_mu, w_ls, b_ls, *, block_b=None, block_n=None,
                     compute_dtype=jnp.bfloat16):
    """Pack both heads into one [d, 2d] weight slab + [1, 2d] fp32 bias slab.

    Call ONCE (weights are static at inference); the interleave + dtype cast is hoisted
    out of the per-call forward path.  w_*: [d_in, d_out] (i.e. nn.Linear weight.T).
    """
    d = w_mu.shape[0]
    assert w_mu.shape == (d, d) and w_ls.shape == (d, d)
    assert b_mu.shape == (d,) and b_ls.shape == (d,)

    vmem_budget = _vmem_budget_bytes()
    if block_b is None:
        block_b = 512 if vmem_budget >= 80 * 1024 * 1024 else 256

    if compute_dtype is None:
        compute_dtype = jnp.bfloat16
    w_bpe = jnp.dtype(compute_dtype).itemsize
    io_bpe = w_bpe

    if block_n is None:
        tn = _choose_tn(d, block_b, w_bpe, io_bpe, vmem_budget)
    else:
        tn = block_n
        assert d % tn == 0 and (tn == d or tn % 128 == 0), "block_n must be d or a 128-multiple divisor of d"
    n_tiles = d // tn

    # Column tile j of the slab holds [W_mu[:, j*tn:(j+1)*tn] | W_ls[:, j*tn:(j+1)*tn]].
    w_f = jnp.stack([w_mu.reshape(d, n_tiles, tn),
                     w_ls.reshape(d, n_tiles, tn)], axis=2).reshape(d, 2 * d)
    w_f = w_f.astype(compute_dtype)
    b_f = jnp.stack([b_mu.reshape(n_tiles, tn),
                     b_ls.reshape(n_tiles, tn)], axis=1).reshape(1, 2 * d)
    b_f = b_f.astype(jnp.float32)

    precision = (jax.lax.Precision.HIGHEST
                 if jnp.dtype(compute_dtype) == jnp.dtype(jnp.float32)
                 else jax.lax.Precision.DEFAULT)

    return {"w": w_f, "b": b_f, "tn": tn, "d": d, "block_b": block_b,
            "compute_dtype": jnp.dtype(compute_dtype).name,
            "precision": precision, "vmem_budget": vmem_budget}


# ---------------------------------------------------------------------------- forward
@functools.partial(
    jax.jit,
    static_argnames=("tn", "block_b", "compute_dtype", "precision", "vmem_budget"))
def _dist_params_call(r, w_f, b_f, *, tn, block_b, compute_dtype, precision, vmem_budget):
    orig_shape = r.shape
    d = orig_shape[-1]
    out_dtype = r.dtype

    r2 = r.reshape(-1, d).astype(jnp.dtype(compute_dtype))
    batch = r2.shape[0]
    n_tiles = d // tn

    # ---- batch (row) tile. No padding: the last row block may be partial (grid cdiv).
    if batch <= block_b:
        tb = batch
        # Give v7x's 2 TensorCores (and the pipeline) at least 2 parallel blocks.
        if n_tiles == 1 and batch >= 16 and batch % 16 == 0:
            tb = batch // 2
    else:
        tb = max(8, (block_b // 8) * 8)
    grid_rows = (batch + tb - 1) // tb

    io_bpe = jnp.dtype(r2.dtype).itemsize
    w_bpe = jnp.dtype(w_f.dtype).itemsize

    # ---- loop order: keep the larger operand resident across the inner grid axis.
    w_bytes = 2 * d * d * w_bpe
    act_bytes = batch * d * io_bpe
    weight_stationary = (n_tiles > 1 and
                         w_bytes * (grid_rows - 1) > act_bytes * (n_tiles - 1))

    if weight_stationary:
        grid = (n_tiles, grid_rows)
        r_map = lambda j, i: (i, 0)       # streams across inner axis
        w_map = lambda j, i: (0, j)       # resident across inner axis
        o_map = lambda j, i: (i, j)
    else:
        grid = (grid_rows, n_tiles)
        r_map = lambda i, j: (i, 0)       # resident across inner axis
        w_map = lambda i, j: (0, j)       # streams across inner axis
        o_map = lambda i, j: (i, j)

    # ---- VMEM limit from the actual (double-buffered) tile footprint, device-clamped.
    vmem_bytes = (2 * d * 2 * tn * w_bpe + 2 * 2 * tn * 4
                  + 2 * tb * d * io_bpe + 2 * 2 * tb * tn * io_bpe)
    vmem_limit = int(min(max(vmem_bytes * 5 // 4 + (1 << 20), 32 * 1024 * 1024),
                         vmem_budget))

    kernel = functools.partial(_dist_params_kernel, precision=precision)
    mu, logsig = pl.pallas_call(
        kernel,
        out_shape=(
            jax.ShapeDtypeStruct((batch, d), out_dtype),
            jax.ShapeDtypeStruct((batch, d), out_dtype),
        ),
        grid_spec=pltpu.PrefetchScalarGridSpec(
            num_scalar_prefetch=0,
            grid=grid,
            in_specs=[
                pl.BlockSpec((tb, d), r_map),        # activations
                pl.BlockSpec((d, 2 * tn), w_map),    # fused weight slab
                pl.BlockSpec((1, 2 * tn), w_map),    # fused fp32 bias
            ],
            out_specs=[
                pl.BlockSpec((tb, tn), o_map),       # mu
                pl.BlockSpec((tb, tn), o_map),       # logsig
            ],
        ),
        compiler_params=pltpu.CompilerParams(
            dimension_semantics=("parallel", "parallel"),
            vmem_limit_bytes=vmem_limit,
        ),
    )(r2, w_f, b_f)

    return mu.reshape(orig_shape), logsig.reshape(orig_shape)


def dist_params_forward(r, packed, *, block_b=None):
    """Fused DistParams forward. r: [..., d]; packed: result of pack_dist_params()."""
    return _dist_params_call(
        r, packed["w"], packed["b"],
        tn=packed["tn"],
        block_b=block_b if block_b is not None else packed["block_b"],
        compute_dtype=packed["compute_dtype"],
        precision=packed["precision"],
        vmem_budget=packed["vmem_budget"])


# ------------------------------------------------------------------------------- init
def init_dist_params(key, model_size, dtype=jnp.float32):
    """nn.Linear-style init (uniform +-1/sqrt(fan_in)); weights stored (in, out)."""
    k1, k2, k3, k4 = jax.random.split(key, 4)
    bound = 1.0 / (model_size ** 0.5)
    w_mu = jax.random.uniform(k1, (model_size, model_size), dtype, -bound, bound)
    b_mu = jax.random.uniform(k2, (model_size,), dtype, -bound, bound)
    w_ls = jax.random.uniform(k3, (model_size, model_size), dtype, -bound, bound)
    b_ls = jax.random.uniform(k4, (model_size,), dtype, -bound, bound)
    return w_mu, b_mu, w_ls, b_ls


if __name__ == "__main__":
    model_size = 128   # lane-dense feature dim
    batch, seq = 2, 8

    key = jax.random.PRNGKey(0)
    kp, kx = jax.random.split(key)
    w_mu, b_mu, w_ls, b_ls = init_dist_params(kp, model_size)
    r = jax.random.normal(kx, (batch, seq, model_size), dtype=jnp.float32)

    # fp32 reference (same math as nn.Linear with transposed weights).
    mu_ref = r @ w_mu + b_mu
    ls_ref = r @ w_ls + b_ls

    # --- default bf16-compute path (native MXU) ---
    packed_bf16 = pack_dist_params(w_mu, b_mu, w_ls, b_ls)   # one-time weight packing
    mu, logsig = dist_params_forward(r, packed_bf16)
    jax.block_until_ready((mu, logsig))
    assert mu.shape == r.shape and logsig.shape == r.shape
    assert jnp.allclose(mu, mu_ref, atol=5e-2, rtol=5e-2), "mu mismatch (bf16 path)"
    assert jnp.allclose(logsig, ls_ref, atol=5e-2, rtol=5e-2), "logsig mismatch (bf16 path)"

    # --- fp32 path with precision=HIGHEST (exact nn.Linear numerics) ---
    packed_f32 = pack_dist_params(w_mu, b_mu, w_ls, b_ls, compute_dtype=jnp.float32)
    mu32, logsig32 = dist_params_forward(r, packed_f32)
    jax.block_until_ready((mu32, logsig32))
    assert jnp.allclose(mu32, mu_ref, atol=1e-4), "mu mismatch (fp32 path)"
    assert jnp.allclose(logsig32, ls_ref, atol=1e-4), "logsig mismatch (fp32 path)"

    print("KERNEL_OK")
</pallas_src>

<mosaic_0001>
module attributes {stable_mosaic.version = 11 : i64} {
  func.func @_dist_params_kernel(%arg0: i32, %arg1: i32, %arg2: memref<8x128xbf16, #tpu.memory_space<vmem>>, %arg3: memref<128x256xbf16, #tpu.memory_space<vmem>>, %arg4: memref<1x256xf32, #tpu.memory_space<vmem>>, %arg5: memref<8x128xf32, #tpu.memory_space<vmem>>, %arg6: memref<8x128xf32, #tpu.memory_space<vmem>>) attributes {dimension_semantics = [#tpu.dimension_semantics<parallel>, #tpu.dimension_semantics<parallel>], iteration_bounds = array<i64: 2, 1>, scalar_prefetch = 0 : i64, scratch_operands = 0 : i64, tpu.core_type = #tpu.core_type<tc>, window_params = [{transform_indices = @transform_0, window_bounds = array<i64: 8, 128>}, {transform_indices = @transform_1, window_bounds = array<i64: 128, 256>}, {transform_indices = @transform_2, window_bounds = array<i64: 1, 256>}, {transform_indices = @transform_3, window_bounds = array<i64: 8, 128>}, {transform_indices = @transform_4, window_bounds = array<i64: 8, 128>}]} {
    %c0 = arith.constant 0 : index
    %c0_0 = arith.constant 0 : index
    %0 = vector.load %arg2[%c0, %c0_0] : memref<8x128xbf16, #tpu.memory_space<vmem>>, vector<8x128xbf16>
    %c0_1 = arith.constant 0 : index
    %c0_2 = arith.constant 0 : index
    %1 = vector.load %arg3[%c0_1, %c0_2] : memref<128x256xbf16, #tpu.memory_space<vmem>>, vector<128x256xbf16>
    %cst = arith.constant dense<0.000000e+00> : vector<8x256xf32>
    %2 = tpu.matmul %0, %1, %cst {dimension_numbers = #tpu.dot_dimension_numbers<[1], [0], [0], [1], [0, 0, 1, 1], [], []>} : vector<8x128xbf16>, vector<128x256xbf16>, vector<8x256xf32> -> vector<8x256xf32>
    %c0_3 = arith.constant 0 : index
    %c0_4 = arith.constant 0 : index
    %3 = vector.load %arg4[%c0_3, %c0_4] : memref<1x256xf32, #tpu.memory_space<vmem>>, vector<1x256xf32>
    %4 = vector.broadcast %3 : vector<1x256xf32> to vector<8x256xf32>
    %5 = arith.addf %2, %4 : vector<8x256xf32>
    %6 = vector.extract_strided_slice %5 {offsets = [0, 0], sizes = [8, 128], strides = [1, 1]} : vector<8x256xf32> to vector<8x128xf32>
    %c0_5 = arith.constant 0 : index
    %c0_6 = arith.constant 0 : index
    %7 = vector.load %arg5[%c0_5, %c0_6] : memref<8x128xf32, #tpu.memory_space<vmem>>, vector<8x128xf32>
    tpu.vector_store %arg5[%c0_5, %c0_6], %6 {strides = array<i32>} : memref<8x128xf32, #tpu.memory_space<vmem>>, vector<8x128xf32>,
    %8 = vector.extract_strided_slice %5 {offsets = [0, 128], sizes = [8, 128], strides = [1, 1]} : vector<8x256xf32> to vector<8x128xf32>
    %c0_7 = arith.constant 0 : index
    %c0_8 = arith.constant 0 : index
    %9 = vector.load %arg6[%c0_7, %c0_8] : memref<8x128xf32, #tpu.memory_space<vmem>>, vector<8x128xf32>
    tpu.vector_store %arg6[%c0_7, %c0_8], %8 {strides = array<i32>} : memref<8x128xf32, #tpu.memory_space<vmem>>, vector<8x128xf32>,
    return
  }
  func.func @transform_0(%arg0: i32, %arg1: i32) -> (i32, i32) {
    %c0_i32 = arith.constant 0 : i32
    %c0_i32_0 = arith.constant 0 : i32
    return %arg0, %c0_i32 : i32, i32
  }
  func.func @transform_1(%arg0: i32, %arg1: i32) -> (i32, i32) {
    %c0_i32 = arith.constant 0 : i32
    %c0_i32_0 = arith.constant 0 : i32
    return %c0_i32, %arg1 : i32, i32
  }
  func.func @transform_2(%arg0: i32, %arg1: i32) -> (i32, i32) {
    %c0_i32 = arith.constant 0 : i32
    %c0_i32_0 = arith.constant 0 : i32
    return %c0_i32, %arg1 : i32, i32
  }
  func.func @transform_3(%arg0: i32, %arg1: i32) -> (i32, i32) {
    %c0_i32 = arith.constant 0 : i32
    return %arg0, %arg1 : i32, i32
  }
  func.func @transform_4(%arg0: i32, %arg1: i32) -> (i32, i32) {
    %c0_i32 = arith.constant 0 : i32
    return %arg0, %arg1 : i32, i32
  }
}

</mosaic_0001>

<llo_original>
// kernel: _dist_params_call.1
$region0: #{_dist_params_call.1}
  #allocation0 [shape = 'u32[]', space=smem, size = 0x4, offset = 0x4, fixed_abs, tag = 'smem constant byte address 0x4 - core index']
  #allocation1 [shape = 'u32[72,128]{1,0:T(1,128)}', space=vmem, size = 0x9000, scoped, tag = 'internal scratch']
  %s0 = inlined_call_operand.vmem [shape: bf16[16,128], index: 0, kind: input, shape index: {}]
  %s1 = inlined_call_operand.hbm [shape: bf16[128,256], index: 1, kind: input, shape index: {}]
  %s2 = inlined_call_operand.vmem [shape: f32[1,256], index: 2, kind: input, shape index: {}]
  %s3 = inlined_call_operand.hbm [shape: f32[16,128], index: 3, kind: output, shape index: {0}]
  %s4 = inlined_call_operand.hbm [shape: f32[16,128], index: 4, kind: output, shape index: {1}]
  %5 = xla_tuple %s3, %s4
  %s6 = sld [smem:[#allocation0]]
  $region57: #{_dist_params_call.1} parent=0
    _
  %s8 = ssub.s32 1, %s6
  %s9 = scalar_select 0, %s8, %s6
  $region1: #{_dist_params_call.1} parent=0
    #allocation2 [shape = 'u8[65536]{0}', space=vmem, size = 0x10000, scoped, tag = 'input window, operand 1, single buffered']
    #allocation3 [shape = 's32[2]{0}', space=sflag, size = 0x8, scoped, tag = 'scoped memory for _dist_params_call.1']
    #allocation4 [shape = 's32[2]{0}', space=sflag, size = 0x8, scoped, tag = 'scoped memory for _dist_params_call.1']
    #allocation5 [shape = 'u8[8192]{0}', space=vmem, size = 0x2000, scoped, tag = 'output window, operand 0']
    #allocation6 [shape = 'u8[8192]{0}', space=vmem, size = 0x2000, scoped, tag = 'output window, operand 1']
    #allocation7 [shape = 's32[2]{0}', space=sflag, size = 0x8, scoped, tag = 'scoped memory for _dist_params_call.1']
    %10 = vsyncpa [#allocation3], 0
    %11 = vsyncpa [#allocation4], 0
    %s12 = scalar_lea.sflag [#allocation4], 1
    %13 = vsyncpa %s12, 0
    %14 = vsyncpa [#allocation7], 0
    %s15 = scalar_lea.sflag [#allocation7], 1
    %16 = vsyncpa %s15, 0
    loop: start=0, step=1, limit=4
    $region2: #{_dist_params_call.1} parent=1 // loop_pre_header
      _
    $region3: #{_dist_params_call.1} parent=1 // loop_header
      %s18 = sphi 0, %s22
      %p19 = scmp.ge.s32.totalorder %s18, 4
      %s25 = sphi 0, %s37
      %s26 = sphi 0, %s33
      %s27 = sphi 0, %s25
      %s28 = sphi 0, %s26
      %s29 = sphi 0, %s27
      %s30 = sphi 0, %s28
      %s40 = sphi 0, %s42
      %s43 = sphi 0, %s40
      %s44 = sphi 0, %s43
      %s60 = sphi 0, %s44
      %s66 = sphi 0, %s68
      %s69 = sphi 0, %s66
      %s70 = sphi 0, %s69
      %s86 = sphi 0, %s70
      %s92 = sphi 0, %s94
      %s95 = sphi 0, %s92
      %s96 = sphi 0, %s95
      %s112 = sphi 0, %s96
      %s120 = sphi 0, %s122
      %s123 = sphi 0, %s120
      %s124 = sphi 0, %s123
      %s140 = sphi 0, %s124
      %s148 = sphi 0, %s150
      %s151 = sphi 0, %s148
      %s152 = sphi 0, %s151
      %s168 = sphi 0, %s152
    $region4: #{_dist_params_call.1} parent=1 // loop_header_branch
      %21 = sbr.rel (%p19) target = $region8
    $region5: #{_dist_params_call.1} parent=1 // loop_body
      %s23 = ssub.s32 %s18, 1
      %s24 = ssub.s32 %s18, 2
      %s31 = sadd.s32 1, %s26
      %p32 = scmp.ge.s32.totalorder %s31, 1
      %s33 = scalar_select %p32, 0, %s31
      %s34 = sadd.s32 1, %s25
      %s35 = scalar_select %p32, %s34, %s25
      %p36 = scmp.ge.s32.totalorder %s35, 2
      %s37 = scalar_select %p36, 0, %s35
      %s38 = ssub.s32 %s25, %s37
      %p39 = scmp.eq.s32.totalorder %s38, 0
      %s41 = sadd.s32 %s40, 1
      %s42 = scalar_select %p39, %s40, %s41
      %p45 = pneg %p39
      %p46 = scmp.eq.s32.totalorder %s18, 1
      %p47 = por %p45, %p46
      %p48 = scmp.ne.s32.totalorder %s40, %s43
      %p49 = scmp.eq.s32.totalorder %s18, 0
      %p50 = por %p48, %p49
      %p51 = scmp.ne.s32.totalorder %s40, %s43
      %p52 = scmp.eq.s32.totalorder %s23, 1
      %p53 = por %p51, %p52
      %p54 = scmp.ne.s32.totalorder %s43, %s44
      %p55 = scmp.eq.s32.totalorder %s23, 0
      %p56 = por %p54, %p55
      %p57 = scmp.ne.s32.totalorder %s43, %s44
      %p58 = scmp.eq.s32.totalorder %s24, 1
      %p59 = por %p57, %p58
      %p61 = scmp.ne.s32.totalorder %s44, %s60
      %p62 = scmp.eq.s32.totalorder %s24, 0
      %p63 = por %p61, %p62
      %s64 = ssub.s32 %s26, %s33
      %p65 = scmp.eq.s32.totalorder %s64, 0
      %s67 = sadd.s32 %s66, 1
      %s68 = scalar_select %p65, %s66, %s67
      %p71 = pneg %p65
      %p72 = scmp.eq.s32.totalorder %s18, 1
      %p73 = por %p71, %p72
      %p74 = scmp.ne.s32.totalorder %s66, %s69
      %p75 = scmp.eq.s32.totalorder %s18, 0
      %p76 = por %p74, %p75
      %p77 = scmp.ne.s32.totalorder %s66, %s69
      %p78 = scmp.eq.s32.totalorder %s23, 1
      %p79 = por %p77, %p78
      %p80 = scmp.ne.s32.totalorder %s69, %s70
      %p81 = scmp.eq.s32.totalorder %s23, 0
      %p82 = por %p80, %p81
      %p83 = scmp.ne.s32.totalorder %s69, %s70
      %p84 = scmp.eq.s32.totalorder %s24, 1
      %p85 = por %p83, %p84
      %p87 = scmp.ne.s32.totalorder %s70, %s86
      %p88 = scmp.eq.s32.totalorder %s24, 0
      %p89 = por %p87, %p88
      %s90 = ssub.s32 %s26, %s33
      %p91 = scmp.eq.s32.totalorder %s90, 0
      %s93 = sadd.s32 %s92, 1
      %s94 = scalar_select %p91, %s92, %s93
      %p97 = pneg %p91
      %p98 = scmp.eq.s32.totalorder %s18, 1
      %p99 = por %p97, %p98
      %p100 = scmp.ne.s32.totalorder %s92, %s95
      %p101 = scmp.eq.s32.totalorder %s18, 0
      %p102 = por %p100, %p101
      %p103 = scmp.ne.s32.totalorder %s92, %s95
      %p104 = scmp.eq.s32.totalorder %s23, 1
      %p105 = por %p103, %p104
      %p106 = scmp.ne.s32.totalorder %s95, %s96
      %p107 = scmp.eq.s32.totalorder %s23, 0
      %p108 = por %p106, %p107
      %p109 = scmp.ne.s32.totalorder %s95, %s96
      %p110 = scmp.eq.s32.totalorder %s24, 1
      %p111 = por %p109, %p110
      %p113 = scmp.ne.s32.totalorder %s96, %s112
      %p114 = scmp.eq.s32.totalorder %s24, 0
      %p115 = por %p113, %p114
      %s116 = ssub.s32 %s25, %s37
      %s117 = ssub.s32 %s26, %s33
      %s118 = sor.u32 %s116, %s117
      %p119 = scmp.eq.s32.totalorder %s118, 0
      %s121 = sadd.s32 %s120, 1
      %s122 = scalar_select %p119, %s120, %s121
      %p125 = pneg %p119
      %p126 = scmp.eq.s32.totalorder %s18, 1
      %p127 = por %p125, %p126
      %p128 = scmp.ne.s32.totalorder %s120, %s123
      %p129 = scmp.eq.s32.totalorder %s18, 0
      %p130 = por %p128, %p129
      %p131 = scmp.ne.s32.totalorder %s120, %s123
      %p132 = scmp.eq.s32.totalorder %s23, 1
      %p133 = por %p131, %p132
      %p134 = scmp.ne.s32.totalorder %s123, %s124
      %p135 = scmp.eq.s32.totalorder %s23, 0
      %p136 = por %p134, %p135
      %p137 = scmp.ne.s32.totalorder %s123, %s124
      %p138 = scmp.eq.s32.totalorder %s24, 1
      %p139 = por %p137, %p138
      %p141 = scmp.ne.s32.totalorder %s124, %s140
      %p142 = scmp.eq.s32.totalorder %s24, 0
      %p143 = por %p141, %p142
      %s144 = ssub.s32 %s25, %s37
      %s145 = ssub.s32 %s26, %s33
      %s146 = sor.u32 %s144, %s145
      %p147 = scmp.eq.s32.totalorder %s146, 0
      %s149 = sadd.s32 %s148, 1
      %s150 = scalar_select %p147, %s148, %s149
      %p153 = pneg %p147
      %p154 = scmp.eq.s32.totalorder %s18, 1
      %p155 = por %p153, %p154
      %p156 = scmp.ne.s32.totalorder %s148, %s151
      %p157 = scmp.eq.s32.totalorder %s18, 0
      %p158 = por %p156, %p157
      %p159 = scmp.ne.s32.totalorder %s148, %s151
      %p160 = scmp.eq.s32.totalorder %s23, 1
      %p161 = por %p159, %p160
      %p162 = scmp.ne.s32.totalorder %s151, %s152
      %p163 = scmp.eq.s32.totalorder %s23, 0
      %p164 = por %p162, %p163
      %p165 = scmp.ne.s32.totalorder %s151, %s152
      %p166 = scmp.eq.s32.totalorder %s24, 1
      %p167 = por %p165, %p166
      %p169 = scmp.ne.s32.totalorder %s152, %s168
      %p170 = scmp.eq.s32.totalorder %s24, 0
      %p171 = por %p169, %p170
      %p172 = scmp.le.s32.totalorder 1, %s18
      %p173 = scmp.lt.s32.totalorder %s18, 3
      %p174 = pnand %p172, %p173
      %p175 = pneg %p174
      // Predicated region
      $region9: #{_dist_params_call.1} parent=5 // pred_check
        _
      $region10: #{_dist_params_call.1} parent=5 // pred_check_branch
        %177 = sbr.rel (%p174) target = $region12
      $region11: #{_dist_params_call.1} parent=5 // pred_region
        %s178 = ssub.s32 %s18, 1
        // Predicated region
        $region13: #{_dist_params_call.1} parent=11 // pred_check
          %p179 = pneg %p82
        $region14: #{_dist_params_call.1} parent=11 // pred_check_branch
          %181 = sbr.rel (%p179) target = $region16
        $region15: #{_dist_params_call.1} parent=11 // pred_region
          %s182 = smul.u32 2, %s28
          %184 = vsyncadd [#allocation3], 0
          %s185 = smul.addr %s182, 4
          %s186 = scalar_lea.hbm %s1, %s185
          %s187 = sshll.u32 %s186, 4
          %s188 = int_to_ptr.hbm [resolvable:$true] %s187
          %s189 = sshll.u32 [#allocation2], 4
          %s190 = int_to_ptr.vmem [resolvable:$true] %s189
          %195 = dma.hbm_to_vmem [thread:$0]  %s188, 2048, %s190, [#allocation3], 128, 128, 8
        $region16: #{_dist_params_call.1} parent=11 // pred_fallthru
          _
        // Predicated region
        $region17: #{_dist_params_call.1} parent=11 // pred_check
          %p196 = pneg %p108
        $region18: #{_dist_params_call.1} parent=11 // pred_check_branch
          %198 = sbr.rel (%p196) target = $region20
        $region19: #{_dist_params_call.1} parent=11 // pred_region
          %s199 = smul.u32 2, %s28
          %p200 = scmp.lt.s32.totalorder %s199, 1
          %s201 = scalar_select %p200, %s199, 1
          %s202 = scalar_lea.vmem %s2, %s201
          %s203 = smul.u32 2, %s28
        $region20: #{_dist_params_call.1} parent=11 // pred_fallthru
          _
      $region12: #{_dist_params_call.1} parent=5 // pred_fallthru
        _
      %p204 = scmp.lt.s32.totalorder %s18, 2
      // Predicated region
      $region21: #{_dist_params_call.1} parent=5 // pred_check
        %p205 = pneg %p204
      $region22: #{_dist_params_call.1} parent=5 // pred_check_branch
        %207 = sbr.rel (%p205) target = $region24
      $region23: #{_dist_params_call.1} parent=5 // pred_region
        // Predicated region
        $region25: #{_dist_params_call.1} parent=23 // pred_check
          %p208 = pneg %p50
        $region26: #{_dist_params_call.1} parent=23 // pred_check_branch
          %210 = sbr.rel (%p208) target = $region28
        $region27: #{_dist_params_call.1} parent=23 // pred_region
          %p211 = scmp.lt.s32.totalorder %s25, 1
          %s212 = scalar_select %p211, %s25, 1
          %s213 = smul.addr %s212, 4
          %s214 = scalar_lea.vmem %s0, %s213
        $region28: #{_dist_params_call.1} parent=23 // pred_fallthru
          _
      $region24: #{_dist_params_call.1} parent=5 // pred_fallthru
        _
      %p215 = scmp.le.s32.totalorder 1, %s18
      %p216 = scmp.lt.s32.totalorder %s18, 3
      %p217 = pnand %p215, %p216
      %p218 = pneg %p217
      // Predicated region
      $region29: #{_dist_params_call.1} parent=5 // pred_check
        _
      $region30: #{_dist_params_call.1} parent=5 // pred_check_branch
        %220 = sbr.rel (%p217) target = $region32
      $region31: #{_dist_params_call.1} parent=5 // pred_region
        %s221 = ssub.s32 %s18, 1
        // Predicated region
        $region33: #{_dist_params_call.1} parent=31 // pred_check
          %p222 = pneg %p82
        $region34: #{_dist_params_call.1} parent=31 // pred_check_branch
          %224 = sbr.rel (%p222) target = $region36
        $region35: #{_dist_params_call.1} parent=31 // pred_region
          %226 = dma.done [#allocation3], 2048
        $region36: #{_dist_params_call.1} parent=31 // pred_fallthru
          _
        %p227 = scmp.lt.s32.totalorder %s27, 1
        %s228 = scalar_select %p227, %s27, 1
        %s229 = smul.addr %s228, 4
        %s230 = scalar_lea.vmem %s0, %s229
        %p231 = pneg %p56
        %p232 = pneg %p53
        %p233 = pneg %p82
        %p234 = pneg %p79
        %s235 = smul.u32 2, %s28
        %p236 = scmp.lt.s32.totalorder %s235, 1
        %s237 = scalar_select %p236, %s235, 1
        %s238 = scalar_lea.vmem %s2, %s237
        %p239 = pneg %p108
        %p240 = pneg %p105
        %p241 = pneg %p136
        %p242 = pneg %p133
        %s243 = sand.u32 %s123, 1
        %s244 = scalar_lea.sflag [#allocation4], %s243
        %s245 = sand.u32 %s123, 1
        %s246 = smul.addr %s245, 8
        %s247 = scalar_lea.vmem [#allocation5], %s246
        %p248 = pneg %p164
        %p249 = pneg %p161
        %s250 = sand.u32 %s151, 1
        %s251 = scalar_lea.sflag [#allocation7], %s250
        %s252 = sand.u32 %s151, 1
        %s253 = smul.addr %s252, 8
        %s254 = scalar_lea.vmem [#allocation6], %s253
        %p255 = scmp.lt.s32.totalorder %s27, 1
        %s256 = scalar_select %p255, %s27, 1
        %s257 = smul.addr %s256, 4
        %s258 = scalar_lea.vmem %s0, %s257
        %s259 = smul.u32 2, %s28
        %s260 = smul.u32 2, %s28
        %p261 = scmp.lt.s32.totalorder %s260, 1
        %s262 = scalar_select %p261, %s260, 1
        %s263 = scalar_lea.vmem %s2, %s262
        %s264 = smul.u32 2, %s28
        %v265 = vld [vmem:[%s258] sm:$0xf]
        %v266 = vld [vmem:[#allocation2] sm:$0xff]
        %v267 = vld [vmem:[#allocation2 + $0x8] sm:$0xff]
        %v268 = vld [vmem:[#allocation2 + $0x10] sm:$0xff]
        %v269 = vld [vmem:[#allocation2 + $0x18] sm:$0xff]
        %v270 = vld [vmem:[#allocation2 + $0x20] sm:$0xff]
        %v271 = vld [vmem:[#allocation2 + $0x28] sm:$0xff]
        %v272 = vld [vmem:[#allocation2 + $0x30] sm:$0xff]
        %v273 = vld [vmem:[#allocation2 + $0x38] sm:$0xff]
        %v274 = vld [vmem:[#allocation2 + $0x40] sm:$0xff]
        %v275 = vld [vmem:[#allocation2 + $0x48] sm:$0xff]
        %v276 = vld [vmem:[#allocation2 + $0x50] sm:$0xff]
        %v277 = vld [vmem:[#allocation2 + $0x58] sm:$0xff]
        %v278 = vld [vmem:[#allocation2 + $0x60] sm:$0xff]
        %v279 = vld [vmem:[#allocation2 + $0x68] sm:$0xff]
        %v280 = vld [vmem:[#allocation2 + $0x70] sm:$0xff]
        %v281 = vld [vmem:[#allocation2 + $0x78] sm:$0xff]
        %v282 = vld [vmem:[%s263] sm:$0x3]
        %v284 = vperm.slane %v282, 0
        %v285 = vperm.slane %v282, 1
        %v304 = vunpack.c.l.b16 %v266
        %v305 = vunpack.c.h.b16 %v266
        %v306 = vunpack.c.l.b16 %v267
        %v307 = vunpack.c.h.b16 %v267
        %v308 = vunpack.c.l.b16 %v268
        %v309 = vunpack.c.h.b16 %v268
        %v310 = vunpack.c.l.b16 %v269
        %v311 = vunpack.c.h.b16 %v269
        %v312 = vunpack.c.l.b16 %v270
        %v313 = vunpack.c.h.b16 %v270
        %v314 = vunpack.c.l.b16 %v271
        %v315 = vunpack.c.h.b16 %v271
        %v316 = vunpack.c.l.b16 %v272
        %v317 = vunpack.c.h.b16 %v272
        %v318 = vunpack.c.l.b16 %v273
        %v319 = vunpack.c.h.b16 %v273
        %v320 = vunpack.c.l.b16 %v274
        %v321 = vunpack.c.h.b16 %v274
        %v322 = vunpack.c.l.b16 %v275
        %v323 = vunpack.c.h.b16 %v275
        %v324 = vunpack.c.l.b16 %v276
        %v325 = vunpack.c.h.b16 %v276
        %v326 = vunpack.c.l.b16 %v277
        %v327 = vunpack.c.h.b16 %v277
        %v328 = vunpack.c.l.b16 %v278
        %v329 = vunpack.c.h.b16 %v278
        %v330 = vunpack.c.l.b16 %v279
        %v331 = vunpack.c.h.b16 %v279
        %v332 = vunpack.c.l.b16 %v280
        %v333 = vunpack.c.h.b16 %v280
        %v334 = vunpack.c.l.b16 %v281
        %v335 = vunpack.c.h.b16 %v281
        %v336 = vpack.c.b16 %v306, %v304
        %v337 = vpack.c.b16 %v307, %v305
        %v338 = vpack.c.b16 %v310, %v308
        %v339 = vpack.c.b16 %v311, %v309
        %v340 = vpack.c.b16 %v314, %v312
        %v341 = vpack.c.b16 %v315, %v313
        %v342 = vpack.c.b16 %v318, %v316
        %v343 = vpack.c.b16 %v319, %v317
        %v344 = vpack.c.b16 %v322, %v320
        %v345 = vpack.c.b16 %v323, %v321
        %v346 = vpack.c.b16 %v326, %v324
        %v347 = vpack.c.b16 %v327, %v325
        %v348 = vpack.c.b16 %v330, %v328
        %v349 = vpack.c.b16 %v331, %v329
        %v350 = vpack.c.b16 %v334, %v332
        %v351 = vpack.c.b16 %v335, %v333
        %368 = vmatpush.bf16.msra.mxu0 %v350
        %369 = vmatpush.bf16.msra.mxu0 %v348
        %370 = vmatpush.bf16.msra.mxu0 %v346
        %371 = vmatpush.bf16.msra.mxu0 %v344
        %372 = vmatpush.bf16.msra.mxu0 %v342
        %373 = vmatpush.bf16.msra.mxu0 %v340
        %374 = vmatpush.bf16.msra.mxu0 %v338
        %375 = vmatpush.bf16.msra.mxu0 %v336
        %376 = vmatmul.bf16.gmra.mxu0 %v265
        %v377 = vpop.f32.mrf.mxu0
        %v378 = vadd.f32 %v284, %v377
        %v379 = vpop.f32.mrf.mxu0
        %380 = vdwg.mxu0
        %381 = vmatpush.bf16.msra.mxu0 %v351
        %382 = vmatpush.bf16.msra.mxu0 %v349
        %383 = vmatpush.bf16.msra.mxu0 %v347
        %384 = vmatpush.bf16.msra.mxu0 %v345
        %385 = vmatpush.bf16.msra.mxu0 %v343
        %386 = vmatpush.bf16.msra.mxu0 %v341
        %387 = vmatpush.bf16.msra.mxu0 %v339
        %388 = vmatpush.bf16.msra.mxu0 %v337
        %389 = vmatmul.bf16.gmra.mxu0 %v265
        %v390 = vpop.f32.mrf.mxu0
        %v391 = vadd.f32 %v285, %v390
        %v392 = vpop.f32.mrf.mxu0
        %393 = vdwg.mxu0
        %394 = vst [vmem:[%s247] sm:$0xff] %v378
        %395 = vst [vmem:[%s254] sm:$0xff] %v391
        %s396 = sand.u32 %s123, 1
        %s397 = scalar_lea.sflag [#allocation4], %s396
        %s398 = sand.u32 %s123, 1
        %s399 = smul.addr %s398, 8
        %s400 = scalar_lea.vmem [#allocation5], %s399
        %s401 = sand.u32 %s151, 1
        %s402 = scalar_lea.sflag [#allocation7], %s401
        %s403 = sand.u32 %s151, 1
        %s404 = smul.addr %s403, 8
        %s405 = scalar_lea.vmem [#allocation6], %s404
        // Predicated region
        $region37: #{_dist_params_call.1} parent=31 // pred_check
          %p406 = pneg %p133
        $region38: #{_dist_params_call.1} parent=31 // pred_check_branch
          %408 = sbr.rel (%p406) target = $region40
        $region39: #{_dist_params_call.1} parent=31 // pred_region
          %410 = vsyncadd %s397, 0
          %s411 = sadd.s32 %s28, %s27
          %s412 = smul.addr %s411, 8
          %s413 = scalar_lea.hbm %s3, %s412
          %s415 = sshll.u32 %s400, 4
          %s416 = int_to_ptr.vmem [resolvable:$true] %s415
          %s417 = sshll.u32 %s413, 4
          %s418 = int_to_ptr.hbm [resolvable:$true] %s417
          %420 = dma.vmem_to_hbm [thread:$0]  %s416, 128, %s418, %s397
        $region40: #{_dist_params_call.1} parent=31 // pred_fallthru
          _
        // Predicated region
        $region41: #{_dist_params_call.1} parent=31 // pred_check
          %p421 = pneg %p161
        $region42: #{_dist_params_call.1} parent=31 // pred_check_branch
          %423 = sbr.rel (%p421) target = $region44
        $region43: #{_dist_params_call.1} parent=31 // pred_region
          %425 = vsyncadd %s402, 0
          %s426 = sadd.s32 %s28, %s27
          %s427 = smul.addr %s426, 8
          %s428 = scalar_lea.hbm %s4, %s427
          %s430 = sshll.u32 %s405, 4
          %s431 = int_to_ptr.vmem [resolvable:$true] %s430
          %s432 = sshll.u32 %s428, 4
          %s433 = int_to_ptr.hbm [resolvable:$true] %s432
          %435 = dma.vmem_to_hbm [thread:$0]  %s431, 128, %s433, %s402
        $region44: #{_dist_params_call.1} parent=31 // pred_fallthru
          _
      $region32: #{_dist_params_call.1} parent=5 // pred_fallthru
        _
      %p436 = scmp.le.s32.totalorder 2, %s18
      // Predicated region
      $region45: #{_dist_params_call.1} parent=5 // pred_check
        %p437 = pneg %p436
      $region46: #{_dist_params_call.1} parent=5 // pred_check_branch
        %439 = sbr.rel (%p437) target = $region48
      $region47: #{_dist_params_call.1} parent=5 // pred_region
        %s440 = ssub.s32 %s18, 2
        // Predicated region
        $region49: #{_dist_params_call.1} parent=47 // pred_check
          %p441 = pneg %p139
        $region50: #{_dist_params_call.1} parent=47 // pred_check_branch
          %443 = sbr.rel (%p441) target = $region52
        $region51: #{_dist_params_call.1} parent=47 // pred_region
          %s444 = sand.u32 %s124, 1
          %s445 = scalar_lea.sflag [#allocation4], %s444
          %s446 = sand.u32 %s124, 1
          %s447 = smul.addr %s446, 8
          %s448 = scalar_lea.vmem [#allocation5], %s447
          %450 = dma.done %s445, 128
        $region52: #{_dist_params_call.1} parent=47 // pred_fallthru
          _
        // Predicated region
        $region53: #{_dist_params_call.1} parent=47 // pred_check
          %p451 = pneg %p167
        $region54: #{_dist_params_call.1} parent=47 // pred_check_branch
          %453 = sbr.rel (%p451) target = $region56
        $region55: #{_dist_params_call.1} parent=47 // pred_region
          %s454 = sand.u32 %s152, 1
          %s455 = scalar_lea.sflag [#allocation7], %s454
          %s456 = sand.u32 %s152, 1
          %s457 = smul.addr %s456, 8
          %s458 = scalar_lea.vmem [#allocation6], %s457
          %460 = dma.done %s455, 128
        $region56: #{_dist_params_call.1} parent=47 // pred_fallthru
          _
      $region48: #{_dist_params_call.1} parent=5 // pred_fallthru
        _
    $region6: #{_dist_params_call.1} parent=1 // loop_footer
      %s22 = sadd.s32 1, %s18
    $region7: #{_dist_params_call.1} parent=1 // loop_footer_branch
      %17 = sbr.rel target = $region3
    $region8: #{_dist_params_call.1} parent=1 // loop_exit
      _
    %461 = vsyncpa [#allocation3], 1
    %s462 = scalar_lea.sflag [#allocation3], 1
    %463 = vsyncpa %s462, 1
    %464 = vsyncpa [#allocation4], 1
    %s465 = scalar_lea.sflag [#allocation4], 1
    %466 = vsyncpa %s465, 1
    %467 = vsyncpa [#allocation7], 1
    %s468 = scalar_lea.sflag [#allocation7], 1
    %469 = vsyncpa %s468, 1

</llo_original>
